<compile_context>
chip_gen: v7x
topology: tpu7x:2x2x1
jax: 0.10.0
libtpu: 0.0.40
codegen_flags: <defaults>
</compile_context>

<pallas_src>
import jax
import jax.numpy as jnp
from jax.experimental import pallas as pl
from jax.experimental.pallas import tpu as pltpu


# ----------------------------------------------------------------------------- helpers
def _round_up(x: int, m: int) -> int:
    return ((x + m - 1) // m) * m


def _largest_divisor_tile(dim: int, candidates=(512, 256, 128)) -> int:
    for c in candidates:
        if dim % c == 0:
            return c
    return dim


def _vmem_capacity_bytes() -> int:
    # Capability probe only (a failed query falls back to the most conservative part).
    try:
        return int(pltpu.get_tpu_info().vmem_capacity_bytes)
    except Exception:
        return 64 * 1024 * 1024        # v7x per-TensorCore capacity


def _vmem_limit_bytes() -> int:
    # Leave ~16 MiB headroom under physical VMEM: v5e/v6e (128 MiB) -> 112 MiB,
    # v7x (64 MiB) -> 48 MiB.
    cap = _vmem_capacity_bytes()
    return int(max(32 * 1024 * 1024, min(cap - 16 * 1024 * 1024, 112 * 1024 * 1024)))


def _choose_tm(B: int, per_row_bytes: int, vmem_budget: int, tm_cap: int = 1024) -> int:
    """Batch tile: as large as the double-buffered x/out tiles allow (amortises the
    ~0.35us per-grid-step overhead), but keep >= 2 grid steps when the batch allows so
    both v7x TensorCores get work (one extra step is negligible on single-TC parts)."""
    B8 = _round_up(max(B, 1), 8)
    fit = max(8, (vmem_budget // max(per_row_bytes, 1)) // 8 * 8)
    tm = min(tm_cap, fit, B8)
    if B8 >= 16:
        tm = min(tm, _round_up((B8 + 1) // 2, 8))
    return max(8, tm)


# ----------------------------------------------------------------------------- kernels
def _expert_fused_kernel(x_ref, w1_ref, b1_ref, w2_ref, b2_ref, o_ref):
    """One batch tile: o = ((x @ W1 + b1) @ W2 + b2), f32 MXU accumulation.

    Weights/biases have constant index_maps -> DMA'd once, resident in VMEM.
    """
    cdt = w1_ref.dtype                                   # MXU compute dtype (bf16)
    h = jnp.dot(x_ref[...].astype(cdt), w1_ref[...], preferred_element_type=jnp.float32)
    h = h + b1_ref[...]                                  # f32 bias add
    # TODO(synk): nn.Dropout is identity under eval semantics; training-mode dropout
    # (random masking + 1/(1-p) scaling) is intentionally not implemented.
    y = jnp.dot(h.astype(cdt), w2_ref[...], preferred_element_type=jnp.float32)
    o_ref[...] = (y + b2_ref[...]).astype(o_ref.dtype)


def _linear_kernel(x_ref, w_ref, b_ref, o_ref, acc_ref):
    """K-tiled y = x @ W + b with a resident f32 VMEM accumulator (fallback path)."""
    @pl.when(pl.program_id(2) == 0)
    def _init():
        acc_ref[...] = jnp.zeros_like(acc_ref)

    acc_ref[...] += jnp.dot(x_ref[...].astype(w_ref.dtype), w_ref[...],
                            preferred_element_type=jnp.float32)

    @pl.when(pl.program_id(2) == pl.num_programs(2) - 1)
    def _finalize():
        o_ref[...] = (acc_ref[...] + b_ref[...]).astype(o_ref.dtype)


def _tiled_linear(x, w, b, out_dtype, vmem_limit):
    B, K = x.shape
    _, N = w.shape
    tk = _largest_divisor_tile(K)
    tn = _largest_divisor_tile(N)
    tm = min(256, _round_up(B, 8))
    grid = (pl.cdiv(B, tm), N // tn, K // tk)
    cost = pl.CostEstimate(
        flops=2 * B * K * N,
        transcendentals=0,
        bytes_accessed=B * K * x.dtype.itemsize + K * N * w.dtype.itemsize
                       + B * N * jnp.dtype(out_dtype).itemsize)
    return pl.pallas_call(
        _linear_kernel,
        out_shape=jax.ShapeDtypeStruct((B, N), out_dtype),
        grid_spec=pltpu.PrefetchScalarGridSpec(
            num_scalar_prefetch=0,
            grid=grid,
            in_specs=[
                pl.BlockSpec((tm, tk), lambda i, j, k: (i, k)),
                pl.BlockSpec((tk, tn), lambda i, j, k: (k, j)),
                pl.BlockSpec((1, tn), lambda i, j, k: (0, j)),
            ],
            out_specs=pl.BlockSpec((tm, tn), lambda i, j, k: (i, j)),
            scratch_shapes=[pltpu.VMEM((tm, tn), jnp.float32)],
        ),
        compiler_params=pltpu.CompilerParams(
            dimension_semantics=("parallel", "parallel", "arbitrary"),
            vmem_limit_bytes=vmem_limit,
        ),
        cost_estimate=cost,
    )(x, w, b)


# ----------------------------------------------------------------------------- wrapper
def prepare_expert_params(w1, b1, w2, b2, *, compute_dtype=jnp.bfloat16):
    """One-time parameter prep (call once, cache, reuse every forward call).

    Pads feature dims to multiples of 128 (lane-dense matmuls and stores; zero padding is
    mathematically exact) and casts weights to the MXU compute dtype.  Weights are stored
    [in_features, out_features] (transposed from PyTorch) so the kernel does plain
    row-major matmuls.  Biases stay f32 for the in-kernel f32 bias add.
    """
    D_in = w1.shape[0]
    D_out = w2.shape[1]
    assert w1.shape == (D_in, D_in) and w2.shape == (D_in, D_out)
    D1 = _round_up(D_in, 128)
    D2 = _round_up(D_out, 128)
    f32 = jnp.float32
    w1p = jnp.zeros((D1, D1), compute_dtype).at[:D_in, :D_in].set(w1.astype(compute_dtype))
    b1p = jnp.zeros((1, D1), f32).at[:, :D_in].set(jnp.reshape(b1, (1, D_in)).astype(f32))
    w2p = jnp.zeros((D1, D2), compute_dtype).at[:D_in, :D_out].set(w2.astype(compute_dtype))
    b2p = jnp.zeros((1, D2), f32).at[:, :D_out].set(jnp.reshape(b2, (1, D_out)).astype(f32))
    return dict(w1=w1p, b1=b1p, w2=w2p, b2=b2p,
                d_in=D_in, d_out=D_out, compute_dtype=compute_dtype)


def expert_apply(params, x, *, force_tiled=False):
    """Apply the Expert to x of shape (..., D_in).  Hot path: no weight prep here."""
    w1p, b1p, w2p, b2p = params["w1"], params["b1"], params["w2"], params["b2"]
    D_in, D_out = params["d_in"], params["d_out"]
    cdt = params["compute_dtype"]
    D1, D2 = w1p.shape[0], w2p.shape[1]

    lead = x.shape[:-1]
    assert x.shape[-1] == D_in
    x2 = x.reshape(-1, D_in)
    B = x2.shape[0]

    # Only pad the activations when D_in is not already lane-aligned (avoids an extra
    # HBM pass in the common aligned case).  The batch dim is never padded: ragged last
    # tiles are handled by Pallas (OOB reads are per-row independent, OOB writes dropped).
    if D1 != D_in:
        x2 = jnp.zeros((B, D1), x.dtype).at[:, :D_in].set(x2)

    out_dtype = x.dtype
    x_bytes = jnp.dtype(x2.dtype).itemsize
    out_bytes = jnp.dtype(out_dtype).itemsize
    w_bytes = jnp.dtype(cdt).itemsize

    vmem_limit = _vmem_limit_bytes()
    budget = vmem_limit - (4 << 20)                       # compiler/scratch headroom
    # Resident-weight footprint: assume Pallas allocates 2 buffers per input even though
    # constant index_map blocks are only DMA'd once.
    wbytes = 2 * (D1 * D1 + D1 * D2) * w_bytes + 2 * (D1 + D2) * 4
    # Per batch-row VMEM: double-buffered x and out tiles + f32 intermediates in-kernel.
    per_row = 2 * D1 * x_bytes + 2 * D2 * out_bytes + 4 * D1 + 4 * D2

    if (not force_tiled) and (wbytes + 8 * per_row <= budget):
        tm = _choose_tm(B, per_row, budget - wbytes)
        grid = (pl.cdiv(B, tm),)
        cost = pl.CostEstimate(
            flops=2 * B * (D1 * D1 + D1 * D2),
            transcendentals=0,
            bytes_accessed=B * D1 * x_bytes + (D1 * D1 + D1 * D2) * w_bytes
                           + (D1 + D2) * 4 + B * D2 * out_bytes)
        out = pl.pallas_call(
            _expert_fused_kernel,
            out_shape=jax.ShapeDtypeStruct((B, D2), out_dtype),
            grid_spec=pltpu.PrefetchScalarGridSpec(
                num_scalar_prefetch=0,
                grid=grid,
                in_specs=[
                    pl.BlockSpec((tm, D1), lambda i: (i, 0)),   # x tile (walks batch)
                    pl.BlockSpec((D1, D1), lambda i: (0, 0)),   # W1 (resident)
                    pl.BlockSpec((1, D1), lambda i: (0, 0)),    # b1 (resident)
                    pl.BlockSpec((D1, D2), lambda i: (0, 0)),   # W2 (resident)
                    pl.BlockSpec((1, D2), lambda i: (0, 0)),    # b2 (resident)
                ],
                out_specs=pl.BlockSpec((tm, D2), lambda i: (i, 0)),
            ),
            compiler_params=pltpu.CompilerParams(
                # Batch axis is embarrassingly parallel -> 2-TC sharding on v7x.
                dimension_semantics=("parallel",),
                vmem_limit_bytes=vmem_limit,
            ),
            cost_estimate=cost,
        )(x2, w1p, b1p, w2p, b2p)
    else:
        # Resident weights don't fit the per-generation VMEM budget (e.g. very wide
        # experts on v7x's 64 MiB VMEM): two K-tiled linears with f32 VMEM accumulators.
        h = _tiled_linear(x2, w1p, b1p, cdt, vmem_limit)
        out = _tiled_linear(h, w2p, b2p, out_dtype, vmem_limit)

    if D2 != D_out:
        out = out[:, :D_out]
    return out.reshape(*lead, D_out)


def expert_forward(x, w1, b1, w2, b2):
    """Convenience one-shot API (preps params every call — prefer prepare_expert_params
    + expert_apply in real MoE code so the weight padding/cast is done once)."""
    return expert_apply(prepare_expert_params(w1, b1, w2, b2), x)


# ----------------------------------------------------------------------------- demo
if __name__ == "__main__":
    # Small shapes consistent with the module's forward. `hidden_dim` is unused by the
    # PyTorch module (its Sequential never references it) and therefore ignored here.
    batch, input_dim, hidden_dim, output_dim = 16, 32, 64, 16

    key = jax.random.PRNGKey(0)
    kx, kw1, kb1, kw2, kb2 = jax.random.split(key, 5)
    x = jax.random.normal(kx, (batch, input_dim), dtype=jnp.float32)
    # PyTorch Linear stores weight as [out, in]; we store the transpose [in, out].
    w1 = jax.random.normal(kw1, (input_dim, input_dim), dtype=jnp.float32) * 0.1
    b1 = jax.random.normal(kb1, (1, input_dim), dtype=jnp.float32) * 0.1
    w2 = jax.random.normal(kw2, (input_dim, output_dim), dtype=jnp.float32) * 0.1
    b2 = jax.random.normal(kb2, (1, output_dim), dtype=jnp.float32) * 0.1

    params = prepare_expert_params(w1, b1, w2, b2)        # one-time prep (cache & reuse)
    out = jax.block_until_ready(expert_apply(params, x))

    # f32 reference (dropout = identity in eval mode).  bf16 compute / f32 accumulation
    # -> tolerance grows roughly with sqrt(D_in); ample margin at these small dims.
    ref = (x @ w1 + b1) @ w2 + b2
    assert out.shape == (batch, output_dim) and out.dtype == x.dtype
    assert jnp.allclose(out, ref, atol=5e-2, rtol=5e-2), "mismatch (fused, small)"

    # Ragged batch + non-128 feature dims: exercises feature padding, the 2-step
    # parallel grid and the masked ragged last batch tile.
    batch2, din2, dout2 = 300, 96, 80
    kx2, kw3, kb3, kw4, kb4 = jax.random.split(jax.random.PRNGKey(1), 5)
    x2 = jax.random.normal(kx2, (batch2, din2), dtype=jnp.float32)
    w3 = jax.random.normal(kw3, (din2, din2), dtype=jnp.float32) * 0.1
    b3 = jax.random.normal(kb3, (1, din2), dtype=jnp.float32) * 0.1
    w4 = jax.random.normal(kw4, (din2, dout2), dtype=jnp.float32) * 0.1
    b4 = jax.random.normal(kb4, (1, dout2), dtype=jnp.float32) * 0.1

    params2 = prepare_expert_params(w3, b3, w4, b4)
    out2 = jax.block_until_ready(expert_apply(params2, x2))
    ref2 = (x2 @ w3 + b3) @ w4 + b4
    assert out2.shape == (batch2, dout2)
    assert jnp.allclose(out2, ref2, atol=1e-1, rtol=1e-1), "mismatch (fused, ragged/padded)"

    # Exercise the K-tiled fallback path (used when resident weights exceed the
    # generation-specific VMEM budget, e.g. very wide experts on v7x).
    out3 = jax.block_until_ready(expert_apply(params, x, force_tiled=True))
    assert jnp.allclose(out3, ref, atol=5e-2, rtol=5e-2), "mismatch (tiled fallback)"

    print("KERNEL_OK")
</pallas_src>

<mosaic_0001>
module attributes {stable_mosaic.version = 11 : i64} {
  func.func @_expert_fused_kernel(%arg0: i32, %arg1: memref<8x128xf32, #tpu.memory_space<vmem>>, %arg2: memref<128x128xbf16, #tpu.memory_space<vmem>>, %arg3: memref<1x128xf32, #tpu.memory_space<vmem>>, %arg4: memref<128x128xbf16, #tpu.memory_space<vmem>>, %arg5: memref<1x128xf32, #tpu.memory_space<vmem>>, %arg6: memref<8x128xf32, #tpu.memory_space<vmem>>) attributes {dimension_semantics = [#tpu.dimension_semantics<parallel>], iteration_bounds = array<i64: 2>, scalar_prefetch = 0 : i64, scratch_operands = 0 : i64, tpu.core_type = #tpu.core_type<tc>, window_params = [{transform_indices = @transform_0, window_bounds = array<i64: 8, 128>}, {pipeline_mode = #tpu.pipeline_mode<synchronous>, transform_indices = @transform_1, window_bounds = array<i64: 128, 128>}, {pipeline_mode = #tpu.pipeline_mode<synchronous>, transform_indices = @transform_2, window_bounds = array<i64: 1, 128>}, {pipeline_mode = #tpu.pipeline_mode<synchronous>, transform_indices = @transform_3, window_bounds = array<i64: 128, 128>}, {pipeline_mode = #tpu.pipeline_mode<synchronous>, transform_indices = @transform_4, window_bounds = array<i64: 1, 128>}, {transform_indices = @transform_5, window_bounds = array<i64: 8, 128>}]} {
    %c0 = arith.constant 0 : index
    %c0_0 = arith.constant 0 : index
    %0 = vector.load %arg1[%c0, %c0_0] : memref<8x128xf32, #tpu.memory_space<vmem>>, vector<8x128xf32>
    %1 = arith.truncf %0 : vector<8x128xf32> to vector<8x128xbf16>
    %c0_1 = arith.constant 0 : index
    %c0_2 = arith.constant 0 : index
    %2 = vector.load %arg2[%c0_1, %c0_2] : memref<128x128xbf16, #tpu.memory_space<vmem>>, vector<128x128xbf16>
    %cst = arith.constant dense<0.000000e+00> : vector<8x128xf32>
    %3 = tpu.matmul %1, %2, %cst {dimension_numbers = #tpu.dot_dimension_numbers<[1], [0], [0], [1], [0, 0, 1, 1], [], []>} : vector<8x128xbf16>, vector<128x128xbf16>, vector<8x128xf32> -> vector<8x128xf32>
    %c0_3 = arith.constant 0 : index
    %c0_4 = arith.constant 0 : index
    %4 = vector.load %arg3[%c0_3, %c0_4] : memref<1x128xf32, #tpu.memory_space<vmem>>, vector<1x128xf32>
    %5 = vector.broadcast %4 : vector<1x128xf32> to vector<8x128xf32>
    %6 = arith.addf %3, %5 : vector<8x128xf32>
    %7 = arith.truncf %6 : vector<8x128xf32> to vector<8x128xbf16>
    %c0_5 = arith.constant 0 : index
    %c0_6 = arith.constant 0 : index
    %8 = vector.load %arg4[%c0_5, %c0_6] : memref<128x128xbf16, #tpu.memory_space<vmem>>, vector<128x128xbf16>
    %cst_7 = arith.constant dense<0.000000e+00> : vector<8x128xf32>
    %9 = tpu.matmul %7, %8, %cst_7 {dimension_numbers = #tpu.dot_dimension_numbers<[1], [0], [0], [1], [0, 0, 1, 1], [], []>} : vector<8x128xbf16>, vector<128x128xbf16>, vector<8x128xf32> -> vector<8x128xf32>
    %c0_8 = arith.constant 0 : index
    %c0_9 = arith.constant 0 : index
    %10 = vector.load %arg5[%c0_8, %c0_9] : memref<1x128xf32, #tpu.memory_space<vmem>>, vector<1x128xf32>
    %11 = vector.broadcast %10 : vector<1x128xf32> to vector<8x128xf32>
    %12 = arith.addf %9, %11 : vector<8x128xf32>
    %c0_10 = arith.constant 0 : index
    %c0_11 = arith.constant 0 : index
    %13 = vector.load %arg6[%c0_10, %c0_11] : memref<8x128xf32, #tpu.memory_space<vmem>>, vector<8x128xf32>
    tpu.vector_store %arg6[%c0_10, %c0_11], %12 {strides = array<i32>} : memref<8x128xf32, #tpu.memory_space<vmem>>, vector<8x128xf32>,
    return
  }
  func.func @transform_0(%arg0: i32) -> (i32, i32) {
    %c0_i32 = arith.constant 0 : i32
    %c0_i32_0 = arith.constant 0 : i32
    return %arg0, %c0_i32 : i32, i32
  }
  func.func @transform_1(%arg0: i32) -> (i32, i32) {
    %c0_i32 = arith.constant 0 : i32
    %c0_i32_0 = arith.constant 0 : i32
    %c0_i32_1 = arith.constant 0 : i32
    return %c0_i32, %c0_i32_0 : i32, i32
  }
  func.func @transform_2(%arg0: i32) -> (i32, i32) {
    %c0_i32 = arith.constant 0 : i32
    %c0_i32_0 = arith.constant 0 : i32
    %c0_i32_1 = arith.constant 0 : i32
    return %c0_i32, %c0_i32_0 : i32, i32
  }
  func.func @transform_3(%arg0: i32) -> (i32, i32) {
    %c0_i32 = arith.constant 0 : i32
    %c0_i32_0 = arith.constant 0 : i32
    %c0_i32_1 = arith.constant 0 : i32
    return %c0_i32, %c0_i32_0 : i32, i32
  }
  func.func @transform_4(%arg0: i32) -> (i32, i32) {
    %c0_i32 = arith.constant 0 : i32
    %c0_i32_0 = arith.constant 0 : i32
    %c0_i32_1 = arith.constant 0 : i32
    return %c0_i32, %c0_i32_0 : i32, i32
  }
  func.func @transform_5(%arg0: i32) -> (i32, i32) {
    %c0_i32 = arith.constant 0 : i32
    %c0_i32_0 = arith.constant 0 : i32
    return %arg0, %c0_i32 : i32, i32
  }
}

</mosaic_0001>

<llo_original>
// kernel: tpu_custom_call.1
$region0: #{tpu_custom_call.1}
  #allocation0 [shape = 'u32[]', space=smem, size = 0x4, offset = 0x4, fixed_abs, tag = 'smem constant byte address 0x4 - core index']
  #allocation1 [shape = 'u32[144,128]{1,0:T(1,128)}', space=vmem, size = 0x12000, scoped, tag = 'internal scratch']
  %s0 = inlined_call_operand.hbm [shape: f32[16,128], index: 0, kind: input, shape index: {}]
  %s1 = inlined_call_operand.hbm [shape: bf16[128,128], index: 1, kind: input, shape index: {}]
  %s2 = inlined_call_operand.vmem [shape: f32[1,128], index: 2, kind: input, shape index: {}]
  %s3 = inlined_call_operand.hbm [shape: bf16[128,128], index: 3, kind: input, shape index: {}]
  %s4 = inlined_call_operand.vmem [shape: f32[1,128], index: 4, kind: input, shape index: {}]
  %s5 = inlined_call_operand.hbm [shape: f32[16,128], index: 5, kind: output, shape index: {}]
  %s6 = sld [smem:[#allocation0]]
  $region65: #{tpu_custom_call.1} parent=0
    _
  %s8 = ssub.s32 1, %s6
  %s9 = scalar_select 0, %s8, %s6
  $region1: #{tpu_custom_call.1} parent=0
    #allocation2 [shape = 'u8[8192]{0}', space=vmem, size = 0x2000, scoped, tag = 'input window, operand 0']
    #allocation3 [shape = 's32[2]{0}', space=sflag, size = 0x8, scoped, tag = 'scoped memory for tpu_custom_call.1']
    #allocation4 [shape = 's32[2]{0}', space=sflag, size = 0x8, scoped, tag = 'scoped memory for tpu_custom_call.1']
    #allocation5 [shape = 'u8[32768]{0}', space=vmem, size = 0x8000, scoped, tag = 'input window, operand 1, single buffered']
    #allocation6 [shape = 's32[1]{0}', space=sflag, size = 0x4, scoped, tag = 'scoped memory for tpu_custom_call.1']
    #allocation7 [shape = 'u8[32768]{0}', space=vmem, size = 0x8000, scoped, tag = 'input window, operand 3, single buffered']
    #allocation8 [shape = 'u8[8192]{0}', space=vmem, size = 0x2000, scoped, tag = 'output window, operand 0']
    %10 = vsyncpa [#allocation3], 0
    %s11 = scalar_lea.sflag [#allocation3], 1
    %12 = vsyncpa %s11, 0
    %13 = vsyncpa [#allocation6], 0
    %14 = vsyncpa [#allocation4], 0
    %s15 = scalar_lea.sflag [#allocation4], 1
    %16 = vsyncpa %s15, 0
    loop: start=0, step=1, limit=4
    $region2: #{tpu_custom_call.1} parent=1 // loop_pre_header
      _
    $region3: #{tpu_custom_call.1} parent=1 // loop_header
      %s18 = sphi 0, %s22
      %p19 = scmp.ge.s32.totalorder %s18, 4
      %s28 = sphi 0, %s30
      %s31 = sphi 0, %s28
      %s32 = sphi 0, %s31
      %s48 = sphi 0, %s32
      %s52 = sphi 0, %s52
      %s54 = sphi 0, %s52
      %s55 = sphi 0, %s54
      %s69 = sphi 0, %s55
      %s73 = sphi 0, %s73
      %s75 = sphi 0, %s73
      %s76 = sphi 0, %s75
      %s90 = sphi 0, %s76
      %s94 = sphi 0, %s94
      %s96 = sphi 0, %s94
      %s97 = sphi 0, %s96
      %s111 = sphi 0, %s97
      %s115 = sphi 0, %s115
      %s117 = sphi 0, %s115
      %s118 = sphi 0, %s117
      %s132 = sphi 0, %s118
      %s138 = sphi 0, %s140
      %s141 = sphi 0, %s138
      %s142 = sphi 0, %s141
      %s158 = sphi 0, %s142
    $region4: #{tpu_custom_call.1} parent=1 // loop_header_branch
      %21 = sbr.rel (%p19) target = $region8
    $region5: #{tpu_custom_call.1} parent=1 // loop_body
      %s23 = ssub.s32 %s18, 1
      %s24 = ssub.s32 %s18, 2
      %s25 = sadd.s32 %s18, 1
      %s26 = ssub.s32 %s18, %s25
      %p27 = scmp.eq.s32.totalorder %s26, 0
      %s29 = sadd.s32 %s28, 1
      %s30 = scalar_select %p27, %s28, %s29
      %p33 = pneg %p27
      %p34 = scmp.eq.s32.totalorder %s18, 1
      %p35 = por %p33, %p34
      %p36 = scmp.ne.s32.totalorder %s28, %s31
      %p37 = scmp.eq.s32.totalorder %s18, 0
      %p38 = por %p36, %p37
      %p39 = scmp.ne.s32.totalorder %s28, %s31
      %p40 = scmp.eq.s32.totalorder %s23, 1
      %p41 = por %p39, %p40
      %p42 = scmp.ne.s32.totalorder %s31, %s32
      %p43 = scmp.eq.s32.totalorder %s23, 0
      %p44 = por %p42, %p43
      %p45 = scmp.ne.s32.totalorder %s31, %s32
      %p46 = scmp.eq.s32.totalorder %s24, 1
      %p47 = por %p45, %p46
      %p49 = scmp.ne.s32.totalorder %s32, %s48
      %p50 = scmp.eq.s32.totalorder %s24, 0
      %p51 = por %p49, %p50
      %s53 = sadd.s32 %s52, 1
      %p56 = scmp.eq.s32.totalorder %s18, 1
      %p57 = scmp.ne.s32.totalorder %s52, %s54
      %p58 = scmp.eq.s32.totalorder %s18, 0
      %p59 = por %p57, %p58
      %p60 = scmp.ne.s32.totalorder %s52, %s54
      %p61 = scmp.eq.s32.totalorder %s23, 1
      %p62 = por %p60, %p61
      %p63 = scmp.ne.s32.totalorder %s54, %s55
      %p64 = scmp.eq.s32.totalorder %s23, 0
      %p65 = por %p63, %p64
      %p66 = scmp.ne.s32.totalorder %s54, %s55
      %p67 = scmp.eq.s32.totalorder %s24, 1
      %p68 = por %p66, %p67
      %p70 = scmp.ne.s32.totalorder %s55, %s69
      %p71 = scmp.eq.s32.totalorder %s24, 0
      %p72 = por %p70, %p71
      %s74 = sadd.s32 %s73, 1
      %p77 = scmp.eq.s32.totalorder %s18, 1
      %p78 = scmp.ne.s32.totalorder %s73, %s75
      %p79 = scmp.eq.s32.totalorder %s18, 0
      %p80 = por %p78, %p79
      %p81 = scmp.ne.s32.totalorder %s73, %s75
      %p82 = scmp.eq.s32.totalorder %s23, 1
      %p83 = por %p81, %p82
      %p84 = scmp.ne.s32.totalorder %s75, %s76
      %p85 = scmp.eq.s32.totalorder %s23, 0
      %p86 = por %p84, %p85
      %p87 = scmp.ne.s32.totalorder %s75, %s76
      %p88 = scmp.eq.s32.totalorder %s24, 1
      %p89 = por %p87, %p88
      %p91 = scmp.ne.s32.totalorder %s76, %s90
      %p92 = scmp.eq.s32.totalorder %s24, 0
      %p93 = por %p91, %p92
      %s95 = sadd.s32 %s94, 1
      %p98 = scmp.eq.s32.totalorder %s18, 1
      %p99 = scmp.ne.s32.totalorder %s94, %s96
      %p100 = scmp.eq.s32.totalorder %s18, 0
      %p101 = por %p99, %p100
      %p102 = scmp.ne.s32.totalorder %s94, %s96
      %p103 = scmp.eq.s32.totalorder %s23, 1
      %p104 = por %p102, %p103
      %p105 = scmp.ne.s32.totalorder %s96, %s97
      %p106 = scmp.eq.s32.totalorder %s23, 0
      %p107 = por %p105, %p106
      %p108 = scmp.ne.s32.totalorder %s96, %s97
      %p109 = scmp.eq.s32.totalorder %s24, 1
      %p110 = por %p108, %p109
      %p112 = scmp.ne.s32.totalorder %s97, %s111
      %p113 = scmp.eq.s32.totalorder %s24, 0
      %p114 = por %p112, %p113
      %s116 = sadd.s32 %s115, 1
      %p119 = scmp.eq.s32.totalorder %s18, 1
      %p120 = scmp.ne.s32.totalorder %s115, %s117
      %p121 = scmp.eq.s32.totalorder %s18, 0
      %p122 = por %p120, %p121
      %p123 = scmp.ne.s32.totalorder %s115, %s117
      %p124 = scmp.eq.s32.totalorder %s23, 1
      %p125 = por %p123, %p124
      %p126 = scmp.ne.s32.totalorder %s117, %s118
      %p127 = scmp.eq.s32.totalorder %s23, 0
      %p128 = por %p126, %p127
      %p129 = scmp.ne.s32.totalorder %s117, %s118
      %p130 = scmp.eq.s32.totalorder %s24, 1
      %p131 = por %p129, %p130
      %p133 = scmp.ne.s32.totalorder %s118, %s132
      %p134 = scmp.eq.s32.totalorder %s24, 0
      %p135 = por %p133, %p134
      %s136 = ssub.s32 %s18, %s25
      %p137 = scmp.eq.s32.totalorder %s136, 0
      %s139 = sadd.s32 %s138, 1
      %s140 = scalar_select %p137, %s138, %s139
      %p143 = pneg %p137
      %p144 = scmp.eq.s32.totalorder %s18, 1
      %p145 = por %p143, %p144
      %p146 = scmp.ne.s32.totalorder %s138, %s141
      %p147 = scmp.eq.s32.totalorder %s18, 0
      %p148 = por %p146, %p147
      %p149 = scmp.ne.s32.totalorder %s138, %s141
      %p150 = scmp.eq.s32.totalorder %s23, 1
      %p151 = por %p149, %p150
      %p152 = scmp.ne.s32.totalorder %s141, %s142
      %p153 = scmp.eq.s32.totalorder %s23, 0
      %p154 = por %p152, %p153
      %p155 = scmp.ne.s32.totalorder %s141, %s142
      %p156 = scmp.eq.s32.totalorder %s24, 1
      %p157 = por %p155, %p156
      %p159 = scmp.ne.s32.totalorder %s142, %s158
      %p160 = scmp.eq.s32.totalorder %s24, 0
      %p161 = por %p159, %p160
      %p162 = scmp.le.s32.totalorder 1, %s18
      %p163 = scmp.lt.s32.totalorder %s18, 3
      %p164 = pnand %p162, %p163
      %p165 = pneg %p164
      // Predicated region
      $region9: #{tpu_custom_call.1} parent=5 // pred_check
        _
      $region10: #{tpu_custom_call.1} parent=5 // pred_check_branch
        %167 = sbr.rel (%p164) target = $region12
      $region11: #{tpu_custom_call.1} parent=5 // pred_region
        %s168 = ssub.s32 %s18, 1
        // Predicated region
        $region13: #{tpu_custom_call.1} parent=11 // pred_check
          %p169 = pneg %p65
        $region14: #{tpu_custom_call.1} parent=11 // pred_check_branch
          %171 = sbr.rel (%p169) target = $region16
        $region15: #{tpu_custom_call.1} parent=11 // pred_region
          %s173 = ssub.s32 1024, 1024
          %174 = vsyncadd [#allocation6], %s173
          %s175 = sshll.u32 [#allocation5], 4
          %s176 = int_to_ptr.vmem [resolvable:$true] %s175
          %181 = dma.hbm_to_vmem [thread:$0]  %s1, 1024, %s176, [#allocation6], 64, 64, 4
        $region16: #{tpu_custom_call.1} parent=11 // pred_fallthru
          _
        // Predicated region
        $region17: #{tpu_custom_call.1} parent=11 // pred_check
          %p182 = pneg %p86
        $region18: #{tpu_custom_call.1} parent=11 // pred_check_branch
          %184 = sbr.rel (%p182) target = $region20
        $region19: #{tpu_custom_call.1} parent=11 // pred_region
          _
        $region20: #{tpu_custom_call.1} parent=11 // pred_fallthru
          _
        // Predicated region
        $region21: #{tpu_custom_call.1} parent=11 // pred_check
          %p185 = pneg %p107
        $region22: #{tpu_custom_call.1} parent=11 // pred_check_branch
          %187 = sbr.rel (%p185) target = $region24
        $region23: #{tpu_custom_call.1} parent=11 // pred_region
          %s189 = ssub.s32 1024, 1024
          %190 = vsyncadd [#allocation6], %s189
          %s191 = sshll.u32 [#allocation7], 4
          %s192 = int_to_ptr.vmem [resolvable:$true] %s191
          %197 = dma.hbm_to_vmem [thread:$0]  %s3, 1024, %s192, [#allocation6], 64, 64, 4
        $region24: #{tpu_custom_call.1} parent=11 // pred_fallthru
          _
        // Predicated region
        $region25: #{tpu_custom_call.1} parent=11 // pred_check
          %p198 = pneg %p128
        $region26: #{tpu_custom_call.1} parent=11 // pred_check_branch
          %200 = sbr.rel (%p198) target = $region28
        $region27: #{tpu_custom_call.1} parent=11 // pred_region
          _
        $region28: #{tpu_custom_call.1} parent=11 // pred_fallthru
          _
      $region12: #{tpu_custom_call.1} parent=5 // pred_fallthru
        _
      %p201 = scmp.lt.s32.totalorder %s18, 2
      // Predicated region
      $region29: #{tpu_custom_call.1} parent=5 // pred_check
        %p202 = pneg %p201
      $region30: #{tpu_custom_call.1} parent=5 // pred_check_branch
        %204 = sbr.rel (%p202) target = $region32
      $region31: #{tpu_custom_call.1} parent=5 // pred_region
        // Predicated region
        $region33: #{tpu_custom_call.1} parent=31 // pred_check
          %p205 = pneg %p38
        $region34: #{tpu_custom_call.1} parent=31 // pred_check_branch
          %207 = sbr.rel (%p205) target = $region36
        $region35: #{tpu_custom_call.1} parent=31 // pred_region
          %s208 = sand.u32 %s28, 1
          %s209 = scalar_lea.sflag [#allocation3], %s208
          %s210 = sand.u32 %s28, 1
          %s211 = smul.addr %s210, 8
          %s212 = scalar_lea.vmem [#allocation2], %s211
          %s214 = ssub.s32 128, 128
          %215 = vsyncadd %s209, %s214
          %s216 = smul.addr %s18, 128
          %s217 = scalar_lea.hbm %s0, %s216
          %s219 = sshll.u32 %s212, 4
          %s220 = int_to_ptr.vmem [resolvable:$true] %s219
          %222 = dma.hbm_to_vmem [thread:$0]  %s217, 128, %s220, %s209
        $region36: #{tpu_custom_call.1} parent=31 // pred_fallthru
          _
      $region32: #{tpu_custom_call.1} parent=5 // pred_fallthru
        _
      %p223 = scmp.le.s32.totalorder 1, %s18
      %p224 = scmp.lt.s32.totalorder %s18, 3
      %p225 = pnand %p223, %p224
      %p226 = pneg %p225
      // Predicated region
      $region37: #{tpu_custom_call.1} parent=5 // pred_check
        _
      $region38: #{tpu_custom_call.1} parent=5 // pred_check_branch
        %228 = sbr.rel (%p225) target = $region40
      $region39: #{tpu_custom_call.1} parent=5 // pred_region
        %s229 = ssub.s32 %s18, 1
        %s230 = sand.u32 %s31, 1
        %s231 = scalar_lea.sflag [#allocation3], %s230
        %s232 = sand.u32 %s31, 1
        %s233 = smul.addr %s232, 8
        %s234 = scalar_lea.vmem [#allocation2], %s233
        // Predicated region
        $region41: #{tpu_custom_call.1} parent=39 // pred_check
          %p235 = pneg %p44
        $region42: #{tpu_custom_call.1} parent=39 // pred_check_branch
          %237 = sbr.rel (%p235) target = $region44
        $region43: #{tpu_custom_call.1} parent=39 // pred_region
          %238 = dma.done %s231, 128
        $region44: #{tpu_custom_call.1} parent=39 // pred_fallthru
          _
        // Predicated region
        $region45: #{tpu_custom_call.1} parent=39 // pred_check
          %p239 = pneg %p65
        $region46: #{tpu_custom_call.1} parent=39 // pred_check_branch
          %241 = sbr.rel (%p239) target = $region48
        $region47: #{tpu_custom_call.1} parent=39 // pred_region
          %242 = dma.done [#allocation6], 1024
        $region48: #{tpu_custom_call.1} parent=39 // pred_fallthru
          _
        // Predicated region
        $region49: #{tpu_custom_call.1} parent=39 // pred_check
          %p243 = pneg %p107
        $region50: #{tpu_custom_call.1} parent=39 // pred_check_branch
          %245 = sbr.rel (%p243) target = $region52
        $region51: #{tpu_custom_call.1} parent=39 // pred_region
          %246 = dma.done [#allocation6], 1024
        $region52: #{tpu_custom_call.1} parent=39 // pred_fallthru
          _
        %s247 = sand.u32 %s31, 1
        %s248 = scalar_lea.sflag [#allocation3], %s247
        %s249 = sand.u32 %s31, 1
        %s250 = smul.addr %s249, 8
        %s251 = scalar_lea.vmem [#allocation2], %s250
        %p252 = pneg %p44
        %p253 = pneg %p41
        %p254 = pneg %p65
        %p255 = pneg %p62
        %p256 = pneg %p86
        %p257 = pneg %p83
        %p258 = pneg %p107
        %p259 = pneg %p104
        %p260 = pneg %p128
        %p261 = pneg %p125
        %p262 = pneg %p154
        %p263 = pneg %p151
        %s264 = sand.u32 %s141, 1
        %s265 = scalar_lea.sflag [#allocation4], %s264
        %s266 = sand.u32 %s141, 1
        %s267 = smul.addr %s266, 8
        %s268 = scalar_lea.vmem [#allocation8], %s267
        %v270 = vld [vmem:[%s234] sm:$0xff]
        %v271 = vpack.c.bf16 %v270, %v270
        %v272 = vld [vmem:[#allocation5] sm:$0xf]
        %v273 = vld [vmem:[#allocation5 + $0x4] sm:$0xf]
        %v274 = vld [vmem:[#allocation5 + $0x8] sm:$0xf]
        %v275 = vld [vmem:[#allocation5 + $0xc] sm:$0xf]
        %v276 = vld [vmem:[#allocation5 + $0x10] sm:$0xf]
        %v277 = vld [vmem:[#allocation5 + $0x14] sm:$0xf]
        %v278 = vld [vmem:[#allocation5 + $0x18] sm:$0xf]
        %v279 = vld [vmem:[#allocation5 + $0x1c] sm:$0xf]
        %v280 = vld [vmem:[#allocation5 + $0x20] sm:$0xf]
        %v281 = vld [vmem:[#allocation5 + $0x24] sm:$0xf]
        %v282 = vld [vmem:[#allocation5 + $0x28] sm:$0xf]
        %v283 = vld [vmem:[#allocation5 + $0x2c] sm:$0xf]
        %v284 = vld [vmem:[#allocation5 + $0x30] sm:$0xf]
        %v285 = vld [vmem:[#allocation5 + $0x34] sm:$0xf]
        %v286 = vld [vmem:[#allocation5 + $0x38] sm:$0xf]
        %v287 = vld [vmem:[#allocation5 + $0x3c] sm:$0xf]
        %v288 = vld [vmem:[%s2] sm:$0x1]
        %v290 = vlaneseq
        %v291 = vshrl.u32 %v290, 7
        %v292 = vsub.s32 0, %v291
        %v293 = vrot.slane %v288, %v292
        %v311 = vunpack.c.l.b16 %v272
        %v312 = vunpack.c.l.b16 %v273
        %v313 = vunpack.c.l.b16 %v274
        %v314 = vunpack.c.l.b16 %v275
        %v315 = vunpack.c.l.b16 %v276
        %v316 = vunpack.c.l.b16 %v277
        %v317 = vunpack.c.l.b16 %v278
        %v318 = vunpack.c.l.b16 %v279
        %v319 = vunpack.c.l.b16 %v280
        %v320 = vunpack.c.l.b16 %v281
        %v321 = vunpack.c.l.b16 %v282
        %v322 = vunpack.c.l.b16 %v283
        %v323 = vunpack.c.l.b16 %v284
        %v324 = vunpack.c.l.b16 %v285
        %v325 = vunpack.c.l.b16 %v286
        %v326 = vunpack.c.l.b16 %v287
        %v327 = vpack.c.b16 %v312, %v311
        %v328 = vpack.c.b16 %v314, %v313
        %v329 = vpack.c.b16 %v316, %v315
        %v330 = vpack.c.b16 %v318, %v317
        %v331 = vpack.c.b16 %v320, %v319
        %v332 = vpack.c.b16 %v322, %v321
        %v333 = vpack.c.b16 %v324, %v323
        %v334 = vpack.c.b16 %v326, %v325
        %343 = vmatprep.subr.bf16.mxu0 0
        %344 = vmatpush1.bf16.msra.mxu0 %v327
        %345 = vmatprep.subr.bf16.mxu0 0
        %346 = vmatpush1.bf16.msra.mxu0 %v328
        %347 = vmatprep.subr.bf16.mxu0 0
        %348 = vmatpush1.bf16.msra.mxu0 %v329
        %349 = vmatprep.subr.bf16.mxu0 0
        %350 = vmatpush1.bf16.msra.mxu0 %v330
        %351 = vmatprep.subr.bf16.mxu0 0
        %352 = vmatpush1.bf16.msra.mxu0 %v331
        %353 = vmatprep.subr.bf16.mxu0 0
        %354 = vmatpush1.bf16.msra.mxu0 %v332
        %355 = vmatprep.subr.bf16.mxu0 0
        %356 = vmatpush1.bf16.msra.mxu0 %v333
        %357 = vmatprep.subr.bf16.mxu0 0
        %358 = vmatpush1.bf16.msra.mxu0 %v334
        %359 = vmatprep.subr.bf16.mxu0 0
        %360 = vmatpush1.bf16.msra.mxu0 0
        %361 = vmatprep.subr.bf16.mxu0 0
        %362 = vmatpush1.bf16.msra.mxu0 0
        %363 = vmatprep.subr.bf16.mxu0 0
        %364 = vmatpush1.bf16.msra.mxu0 0
        %365 = vmatprep.subr.bf16.mxu0 0
        %366 = vmatpush1.bf16.msra.mxu0 0
        %367 = vmatprep.subr.bf16.mxu0 0
        %368 = vmatpush1.bf16.msra.mxu0 0
        %369 = vmatprep.subr.bf16.mxu0 0
        %370 = vmatpush1.bf16.msra.mxu0 0
        %371 = vmatprep.subr.bf16.mxu0 0
        %372 = vmatpush1.bf16.msra.mxu0 0
        %373 = vmatprep.subr.bf16.mxu0 0
        %374 = vmatpush1.bf16.msra.mxu0 0
        %375 = vmatprep.mubr.bf16.mxu0 0
        %376 = vmatmul.mubr.bf16.gmra.mrb[0].mxu0 %v271
        %v377 = vpop.f32.mrb[0].mxu0
        %v378 = vadd.f32 %v293, %v377
        %v379 = vpop.f32.mrb[0].mxu0
        %v380 = vpop.f32.mrb[0].mxu0
        %v381 = vpop.f32.mrb[0].mxu0
        %382 = vdwg.mxu0
        %v383 = vpack.c.bf16 %v378, %v378
        %v384 = vld [vmem:[#allocation7] sm:$0xf]
        %v385 = vld [vmem:[#allocation7 + $0x4] sm:$0xf]
        %v386 = vld [vmem:[#allocation7 + $0x8] sm:$0xf]
        %v387 = vld [vmem:[#allocation7 + $0xc] sm:$0xf]
        %v388 = vld [vmem:[#allocation7 + $0x10] sm:$0xf]
        %v389 = vld [vmem:[#allocation7 + $0x14] sm:$0xf]
        %v390 = vld [vmem:[#allocation7 + $0x18] sm:$0xf]
        %v391 = vld [vmem:[#allocation7 + $0x1c] sm:$0xf]
        %v392 = vld [vmem:[#allocation7 + $0x20] sm:$0xf]
        %v393 = vld [vmem:[#allocation7 + $0x24] sm:$0xf]
        %v394 = vld [vmem:[#allocation7 + $0x28] sm:$0xf]
        %v395 = vld [vmem:[#allocation7 + $0x2c] sm:$0xf]
        %v396 = vld [vmem:[#allocation7 + $0x30] sm:$0xf]
        %v397 = vld [vmem:[#allocation7 + $0x34] sm:$0xf]
        %v398 = vld [vmem:[#allocation7 + $0x38] sm:$0xf]
        %v399 = vld [vmem:[#allocation7 + $0x3c] sm:$0xf]
        %v400 = vld [vmem:[%s4] sm:$0x1]
        %v402 = vlaneseq
        %v403 = vshrl.u32 %v402, 7
        %v404 = vsub.s32 0, %v403
        %v405 = vrot.slane %v400, %v404
        %v423 = vunpack.c.l.b16 %v384
        %v424 = vunpack.c.l.b16 %v385
        %v425 = vunpack.c.l.b16 %v386
        %v426 = vunpack.c.l.b16 %v387
        %v427 = vunpack.c.l.b16 %v388
        %v428 = vunpack.c.l.b16 %v389
        %v429 = vunpack.c.l.b16 %v390
        %v430 = vunpack.c.l.b16 %v391
        %v431 = vunpack.c.l.b16 %v392
        %v432 = vunpack.c.l.b16 %v393
        %v433 = vunpack.c.l.b16 %v394
        %v434 = vunpack.c.l.b16 %v395
        %v435 = vunpack.c.l.b16 %v396
        %v436 = vunpack.c.l.b16 %v397
        %v437 = vunpack.c.l.b16 %v398
        %v438 = vunpack.c.l.b16 %v399
        %v439 = vpack.c.b16 %v424, %v423
        %v440 = vpack.c.b16 %v426, %v425
        %v441 = vpack.c.b16 %v428, %v427
        %v442 = vpack.c.b16 %v430, %v429
        %v443 = vpack.c.b16 %v432, %v431
        %v444 = vpack.c.b16 %v434, %v433
        %v445 = vpack.c.b16 %v436, %v435
        %v446 = vpack.c.b16 %v438, %v437
        %455 = vmatprep.subr.bf16.mxu0 0
        %456 = vmatpush1.bf16.msra.mxu0 %v439
        %457 = vmatprep.subr.bf16.mxu0 0
        %458 = vmatpush1.bf16.msra.mxu0 %v440
        %459 = vmatprep.subr.bf16.mxu0 0
        %460 = vmatpush1.bf16.msra.mxu0 %v441
        %461 = vmatprep.subr.bf16.mxu0 0
        %462 = vmatpush1.bf16.msra.mxu0 %v442
        %463 = vmatprep.subr.bf16.mxu0 0
        %464 = vmatpush1.bf16.msra.mxu0 %v443
        %465 = vmatprep.subr.bf16.mxu0 0
        %466 = vmatpush1.bf16.msra.mxu0 %v444
        %467 = vmatprep.subr.bf16.mxu0 0
        %468 = vmatpush1.bf16.msra.mxu0 %v445
        %469 = vmatprep.subr.bf16.mxu0 0
        %470 = vmatpush1.bf16.msra.mxu0 %v446
        %471 = vmatprep.subr.bf16.mxu0 0
        %472 = vmatpush1.bf16.msra.mxu0 0
        %473 = vmatprep.subr.bf16.mxu0 0
        %474 = vmatpush1.bf16.msra.mxu0 0
        %475 = vmatprep.subr.bf16.mxu0 0
        %476 = vmatpush1.bf16.msra.mxu0 0
        %477 = vmatprep.subr.bf16.mxu0 0
        %478 = vmatpush1.bf16.msra.mxu0 0
        %479 = vmatprep.subr.bf16.mxu0 0
        %480 = vmatpush1.bf16.msra.mxu0 0
        %481 = vmatprep.subr.bf16.mxu0 0
        %482 = vmatpush1.bf16.msra.mxu0 0
        %483 = vmatprep.subr.bf16.mxu0 0
        %484 = vmatpush1.bf16.msra.mxu0 0
        %485 = vmatprep.subr.bf16.mxu0 0
        %486 = vmatpush1.bf16.msra.mxu0 0
        %487 = vmatprep.mubr.bf16.mxu0 0
        %488 = vmatmul.mubr.bf16.gmra.mrb[0].mxu0 %v383
        %v489 = vpop.f32.mrb[0].mxu0
        %v490 = vadd.f32 %v405, %v489
        %v491 = vpop.f32.mrb[0].mxu0
        %v492 = vpop.f32.mrb[0].mxu0
        %v493 = vpop.f32.mrb[0].mxu0
        %494 = vdwg.mxu0
        %495 = vst [vmem:[%s268] sm:$0xff] %v490
        %s496 = sand.u32 %s141, 1
        %s497 = scalar_lea.sflag [#allocation4], %s496
        %s498 = sand.u32 %s141, 1
        %s499 = smul.addr %s498, 8
        %s500 = scalar_lea.vmem [#allocation8], %s499
        // Predicated region
        $region53: #{tpu_custom_call.1} parent=39 // pred_check
          %p501 = pneg %p151
        $region54: #{tpu_custom_call.1} parent=39 // pred_check_branch
          %503 = sbr.rel (%p501) target = $region56
        $region55: #{tpu_custom_call.1} parent=39 // pred_region
          %s505 = ssub.s32 128, 128
          %506 = vsyncadd %s497, %s505
          %s507 = smul.addr %s23, 128
          %s508 = scalar_lea.hbm %s5, %s507
          %s510 = sshll.u32 %s500, 4
          %s511 = int_to_ptr.vmem [resolvable:$true] %s510
          %513 = dma.vmem_to_hbm [thread:$0]  %s511, 128, %s508, %s497
        $region56: #{tpu_custom_call.1} parent=39 // pred_fallthru
          _
      $region40: #{tpu_custom_call.1} parent=5 // pred_fallthru
        _
      %p514 = scmp.le.s32.totalorder 2, %s18
      // Predicated region
      $region57: #{tpu_custom_call.1} parent=5 // pred_check
        %p515 = pneg %p514
      $region58: #{tpu_custom_call.1} parent=5 // pred_check_branch
        %517 = sbr.rel (%p515) target = $region60
      $region59: #{tpu_custom_call.1} parent=5 // pred_region
        %s518 = ssub.s32 %s18, 2
        // Predicated region
        $region61: #{tpu_custom_call.1} parent=59 // pred_check
          %p519 = pneg %p157
        $region62: #{tpu_custom_call.1} parent=59 // pred_check_branch
          %521 = sbr.rel (%p519) target = $region64
        $region63: #{tpu_custom_call.1} parent=59 // pred_region
          %s522 = sand.u32 %s142, 1
          %s523 = scalar_lea.sflag [#allocation4], %s522
          %s524 = sand.u32 %s142, 1
          %s525 = smul.addr %s524, 8
          %s526 = scalar_lea.vmem [#allocation8], %s525
          %527 = dma.done %s523, 128
        $region64: #{tpu_custom_call.1} parent=59 // pred_fallthru
          _
      $region60: #{tpu_custom_call.1} parent=5 // pred_fallthru
        _
    $region6: #{tpu_custom_call.1} parent=1 // loop_footer
      %s22 = sadd.s32 1, %s18
    $region7: #{tpu_custom_call.1} parent=1 // loop_footer_branch
      %17 = sbr.rel target = $region3
    $region8: #{tpu_custom_call.1} parent=1 // loop_exit
      _
    %528 = vsyncpa [#allocation3], 1
    %s529 = scalar_lea.sflag [#allocation3], 1
    %530 = vsyncpa %s529, 1
    %531 = vsyncpa [#allocation6], 1
    %532 = vsyncpa [#allocation4], 1
    %s533 = scalar_lea.sflag [#allocation4], 1
    %534 = vsyncpa %s533, 1

</llo_original>
